<compile_context>
chip_gen: v7x
topology: tpu7x:2x2x1
jax: 0.10.0
libtpu: 0.0.40
codegen_flags: <defaults>
</compile_context>

<pallas_src>
import numpy as np
import jax
import jax.numpy as jnp
from jax.experimental import pallas as pl
from jax.experimental.pallas import tpu as pltpu

_TILE_BYTES = 4 * 1024 * 1024  # per-block budget


def identity(x: jax.Array) -> jax.Array:
    """Identity forward pass. Pure no-op — the optimal implementation."""
    return x


def _copy_kernel(x_ref, o_ref):
    # Passthrough: copy the current VMEM tile to the output tile.
    o_ref[...] = x_ref[...]


def _choose_cols(n: int):
    """Largest lane-dense width (multiple of 128) that exactly divides n."""
    for c in (4096, 2048, 1024, 512, 256, 128):
        if n % c == 0:
            return c
    return None


@jax.jit
def identity_pallas(x: jax.Array) -> jax.Array:
    """Identity as an explicit, optimized Pallas TPU copy kernel."""
    orig_shape = x.shape
    dtype = x.dtype

    flat = x.reshape(-1)
    n = flat.shape[0]
    if n == 0:
        return x

    cols = _choose_cols(n)
    if cols is None:
        # Small / irregular total size: a single whole-array block
        # (full-extent dims satisfy the (8,128) rule).
        # TODO(synk): pad-to-128-multiple tiled path for large sizes not divisible by 128.
        rows, cols = 1, n
        tr, tc = 1, n
    else:
        rows = n // cols
        tc = min(cols, 1024)  # lane-dense tile width, multiple of 128
        # Rows per tile: fit the byte budget; multiple of 8 sublanes, or full extent.
        row_budget = max(8, (_TILE_BYTES // (tc * dtype.itemsize)) // 8 * 8)
        tr = rows if rows <= row_budget else row_budget

    x2 = flat.reshape(rows, cols)
    grid = (pl.cdiv(rows, tr), pl.cdiv(cols, tc))

    out2 = pl.pallas_call(
        _copy_kernel,
        out_shape=jax.ShapeDtypeStruct((rows, cols), dtype),
        grid=grid,
        in_specs=[pl.BlockSpec((tr, tc), lambda i, j: (i, j))],
        out_specs=pl.BlockSpec((tr, tc), lambda i, j: (i, j)),
        input_output_aliases={0: 0},  # allow the input buffer to be donated
        compiler_params=pltpu.CompilerParams(
            dimension_semantics=("parallel", "parallel"),
            vmem_limit_bytes=32 * 1024 * 1024,
        ),
    )(x2)

    return out2.reshape(orig_shape)


if __name__ == "__main__":
    key = jax.random.PRNGKey(0)
    # Small NCHW input consistent with typical resnet usage: (N=2, C=4, H=16, W=16)
    x = jax.random.normal(key, (2, 4, 16, 16), dtype=jnp.float32)

    # Preferred path: true no-op identity.
    y0 = identity(x)
    assert y0 is x

    # Explicit Pallas kernel path.
    x_expected = np.asarray(x)  # snapshot before the (aliased) kernel call
    y = identity_pallas(x)
    jax.block_until_ready(y)

    assert y.shape == x.shape and y.dtype == x.dtype
    assert np.array_equal(np.asarray(y), x_expected)
    print("KERNEL_OK")
</pallas_src>

<mosaic_0001>
module attributes {stable_mosaic.version = 11 : i64} {
  func.func @_copy_kernel(%arg0: i32, %arg1: i32, %arg2: memref<1x1024xf32, #tpu.memory_space<vmem>>, %arg3: memref<1x1024xf32, #tpu.memory_space<vmem>>) attributes {dimension_semantics = [#tpu.dimension_semantics<parallel>, #tpu.dimension_semantics<parallel>], iteration_bounds = array<i64: 1, 2>, scalar_prefetch = 0 : i64, scratch_operands = 0 : i64, tpu.core_type = #tpu.core_type<tc>, window_params = [{transform_indices = @transform_0, window_bounds = array<i64: 1, 1024>}, {transform_indices = @transform_1, window_bounds = array<i64: 1, 1024>}]} {
    %c0 = arith.constant 0 : index
    %c0_0 = arith.constant 0 : index
    %0 = vector.load %arg2[%c0, %c0_0] : memref<1x1024xf32, #tpu.memory_space<vmem>>, vector<1x1024xf32>
    %c0_1 = arith.constant 0 : index
    %c0_2 = arith.constant 0 : index
    %1 = vector.load %arg3[%c0_1, %c0_2] : memref<1x1024xf32, #tpu.memory_space<vmem>>, vector<1x1024xf32>
    tpu.vector_store %arg3[%c0_1, %c0_2], %0 {strides = array<i32>} : memref<1x1024xf32, #tpu.memory_space<vmem>>, vector<1x1024xf32>,
    return
  }
  func.func @transform_0(%arg0: i32, %arg1: i32) -> (i32, i32) {
    %c0_i32 = arith.constant 0 : i32
    return %arg0, %arg1 : i32, i32
  }
  func.func @transform_1(%arg0: i32, %arg1: i32) -> (i32, i32) {
    %c0_i32 = arith.constant 0 : i32
    return %arg0, %arg1 : i32, i32
  }
}

</mosaic_0001>

<llo_original>
// kernel: identity_pallas.1
$region0: #{identity_pallas.1}
  #allocation0 [shape = 'u32[]', space=smem, size = 0x4, offset = 0x4, fixed_abs, tag = 'smem constant byte address 0x4 - core index']
  #allocation1 [shape = 'u32[144,128]{1,0:T(1,128)}', space=vmem, size = 0x12000, scoped, tag = 'internal scratch']
  %s0 = inlined_call_operand.vmem [shape: f32[1,2048], index: 0, kind: input, shape index: {}, may-alias: {0,1}]
  %s1 = inlined_call_operand.vmem [shape: f32[1,2048], index: 1, kind: output, shape index: {}, may-alias: {0,1}]
  %s2 = sld [smem:[#allocation0]]
  $region37: #{identity_pallas.1} parent=0
    _
  %s4 = ssub.s32 1, %s2
  %s5 = scalar_select 0, %s4, %s2
  loop: start=0, step=1, limit=4
  $region2: #{identity_pallas.1} parent=0 // loop_pre_header
    _
  $region3: #{identity_pallas.1} parent=0 // loop_header
    %s7 = sphi 0, %s11
    %p8 = scmp.ge.s32.totalorder %s7, 4
    %s14 = sphi 0, %s26
    %s15 = sphi 0, %s22
    %s16 = sphi 0, %s14
    %s17 = sphi 0, %s15
    %s18 = sphi 0, %s16
    %s19 = sphi 0, %s17
    %s31 = sphi 0, %s33
    %s34 = sphi 0, %s31
    %s35 = sphi 0, %s34
    %s51 = sphi 0, %s35
    %s59 = sphi 0, %s61
    %s62 = sphi 0, %s59
    %s63 = sphi 0, %s62
    %s79 = sphi 0, %s63
  $region4: #{identity_pallas.1} parent=0 // loop_header_branch
    %10 = sbr.rel (%p8) target = $region8
  $region5: #{identity_pallas.1} parent=0 // loop_body
    %s12 = ssub.s32 %s7, 1
    %s13 = ssub.s32 %s7, 2
    %s20 = sadd.s32 1, %s15
    %p21 = scmp.ge.s32.totalorder %s20, 2
    %s22 = scalar_select %p21, 0, %s20
    %s23 = sadd.s32 1, %s14
    %s24 = scalar_select %p21, %s23, %s14
    %p25 = scmp.ge.s32.totalorder %s24, 1
    %s26 = scalar_select %p25, 0, %s24
    %s27 = ssub.s32 %s14, %s26
    %s28 = ssub.s32 %s15, %s22
    %s29 = sor.u32 %s27, %s28
    %p30 = scmp.eq.s32.totalorder %s29, 0
    %s32 = sadd.s32 %s31, 1
    %s33 = scalar_select %p30, %s31, %s32
    %p36 = pneg %p30
    %p37 = scmp.eq.s32.totalorder %s7, 1
    %p38 = por %p36, %p37
    %p39 = scmp.ne.s32.totalorder %s31, %s34
    %p40 = scmp.eq.s32.totalorder %s7, 0
    %p41 = por %p39, %p40
    %p42 = scmp.ne.s32.totalorder %s31, %s34
    %p43 = scmp.eq.s32.totalorder %s12, 1
    %p44 = por %p42, %p43
    %p45 = scmp.ne.s32.totalorder %s34, %s35
    %p46 = scmp.eq.s32.totalorder %s12, 0
    %p47 = por %p45, %p46
    %p48 = scmp.ne.s32.totalorder %s34, %s35
    %p49 = scmp.eq.s32.totalorder %s13, 1
    %p50 = por %p48, %p49
    %p52 = scmp.ne.s32.totalorder %s35, %s51
    %p53 = scmp.eq.s32.totalorder %s13, 0
    %p54 = por %p52, %p53
    %s55 = ssub.s32 %s14, %s26
    %s56 = ssub.s32 %s15, %s22
    %s57 = sor.u32 %s55, %s56
    %p58 = scmp.eq.s32.totalorder %s57, 0
    %s60 = sadd.s32 %s59, 1
    %s61 = scalar_select %p58, %s59, %s60
    %p64 = pneg %p58
    %p65 = scmp.eq.s32.totalorder %s7, 1
    %p66 = por %p64, %p65
    %p67 = scmp.ne.s32.totalorder %s59, %s62
    %p68 = scmp.eq.s32.totalorder %s7, 0
    %p69 = por %p67, %p68
    %p70 = scmp.ne.s32.totalorder %s59, %s62
    %p71 = scmp.eq.s32.totalorder %s12, 1
    %p72 = por %p70, %p71
    %p73 = scmp.ne.s32.totalorder %s62, %s63
    %p74 = scmp.eq.s32.totalorder %s12, 0
    %p75 = por %p73, %p74
    %p76 = scmp.ne.s32.totalorder %s62, %s63
    %p77 = scmp.eq.s32.totalorder %s13, 1
    %p78 = por %p76, %p77
    %p80 = scmp.ne.s32.totalorder %s63, %s79
    %p81 = scmp.eq.s32.totalorder %s13, 0
    %p82 = por %p80, %p81
    %p83 = scmp.le.s32.totalorder 1, %s7
    %p84 = scmp.lt.s32.totalorder %s7, 3
    %p85 = pnand %p83, %p84
    %p86 = pneg %p85
    // Predicated region
    $region9: #{identity_pallas.1} parent=5 // pred_check
      _
    $region10: #{identity_pallas.1} parent=5 // pred_check_branch
      %88 = sbr.rel (%p85) target = $region12
    $region11: #{identity_pallas.1} parent=5 // pred_region
      %s89 = ssub.s32 %s7, 1
    $region12: #{identity_pallas.1} parent=5 // pred_fallthru
      _
    %p90 = scmp.lt.s32.totalorder %s7, 2
    // Predicated region
    $region13: #{identity_pallas.1} parent=5 // pred_check
      %p91 = pneg %p90
    $region14: #{identity_pallas.1} parent=5 // pred_check_branch
      %93 = sbr.rel (%p91) target = $region16
    $region15: #{identity_pallas.1} parent=5 // pred_region
      // Predicated region
      $region17: #{identity_pallas.1} parent=15 // pred_check
        %p94 = pneg %p41
      $region18: #{identity_pallas.1} parent=15 // pred_check_branch
        %96 = sbr.rel (%p94) target = $region20
      $region19: #{identity_pallas.1} parent=15 // pred_region
        %s97 = smul.u32 8, %s15
        %p98 = scmp.lt.s32.totalorder %s14, 0
        %s99 = scalar_select %p98, %s14, 0
        %p100 = scmp.lt.s32.totalorder %s97, 15
        %s101 = scalar_select %p100, %s97, 15
        %s102 = smul.addr %s99, 16
        %s103 = sadd.s32 %s101, %s102
        %s104 = scalar_lea.vmem %s0, %s103
        %s105 = smul.u32 8, %s15
      $region20: #{identity_pallas.1} parent=15 // pred_fallthru
        _
    $region16: #{identity_pallas.1} parent=5 // pred_fallthru
      _
    %p106 = scmp.le.s32.totalorder 1, %s7
    %p107 = scmp.lt.s32.totalorder %s7, 3
    %p108 = pnand %p106, %p107
    %p109 = pneg %p108
    // Predicated region
    $region21: #{identity_pallas.1} parent=5 // pred_check
      _
    $region22: #{identity_pallas.1} parent=5 // pred_check_branch
      %111 = sbr.rel (%p108) target = $region24
    $region23: #{identity_pallas.1} parent=5 // pred_region
      %s112 = ssub.s32 %s7, 1
      %s113 = smul.u32 8, %s17
      %p114 = scmp.lt.s32.totalorder %s16, 0
      %s115 = scalar_select %p114, %s16, 0
      %p116 = scmp.lt.s32.totalorder %s113, 15
      %s117 = scalar_select %p116, %s113, 15
      %s118 = smul.addr %s115, 16
      %s119 = sadd.s32 %s117, %s118
      %s120 = scalar_lea.vmem %s0, %s119
      %p121 = pneg %p47
      %p122 = pneg %p44
      %p123 = pneg %p75
      %p124 = pneg %p72
      %s125 = smul.u32 8, %s17
      %p126 = scmp.lt.s32.totalorder %s16, 0
      %s127 = scalar_select %p126, %s16, 0
      %p128 = scmp.lt.s32.totalorder %s125, 15
      %s129 = scalar_select %p128, %s125, 15
      %s130 = smul.addr %s127, 16
      %s131 = sadd.s32 %s129, %s130
      %s132 = scalar_lea.vmem %s1, %s131
      %s133 = smul.u32 8, %s17
      %p134 = scmp.lt.s32.totalorder %s16, 0
      %s135 = scalar_select %p134, %s16, 0
      %p136 = scmp.lt.s32.totalorder %s133, 15
      %s137 = scalar_select %p136, %s133, 15
      %s138 = smul.addr %s135, 16
      %s139 = sadd.s32 %s137, %s138
      %s140 = scalar_lea.vmem %s0, %s139
      %s141 = smul.u32 8, %s17
      %s142 = smul.u32 8, %s17
      %p143 = scmp.lt.s32.totalorder %s16, 0
      %s144 = scalar_select %p143, %s16, 0
      %p145 = scmp.lt.s32.totalorder %s142, 15
      %s146 = scalar_select %p145, %s142, 15
      %s147 = smul.addr %s144, 16
      %s148 = sadd.s32 %s146, %s147
      %s149 = scalar_lea.vmem %s1, %s148
      %s150 = smul.u32 8, %s17
      %v151 = vld [vmem:[%s140] sm:$0xff]
      %152 = vst [vmem:[%s149] sm:$0xff] %v151
      %s153 = smul.u32 8, %s17
      %p154 = scmp.lt.s32.totalorder %s16, 0
      %s155 = scalar_select %p154, %s16, 0
      %p156 = scmp.lt.s32.totalorder %s153, 15
      %s157 = scalar_select %p156, %s153, 15
      %s158 = smul.addr %s155, 16
      %s159 = sadd.s32 %s157, %s158
      %s160 = scalar_lea.vmem %s1, %s159
      // Predicated region
      $region25: #{identity_pallas.1} parent=23 // pred_check
        %p161 = pneg %p72
      $region26: #{identity_pallas.1} parent=23 // pred_check_branch
        %163 = sbr.rel (%p161) target = $region28
      $region27: #{identity_pallas.1} parent=23 // pred_region
        %s164 = smul.u32 8, %s17
      $region28: #{identity_pallas.1} parent=23 // pred_fallthru
        _
    $region24: #{identity_pallas.1} parent=5 // pred_fallthru
      _
    %p165 = scmp.le.s32.totalorder 2, %s7
    // Predicated region
    $region29: #{identity_pallas.1} parent=5 // pred_check
      %p166 = pneg %p165
    $region30: #{identity_pallas.1} parent=5 // pred_check_branch
      %168 = sbr.rel (%p166) target = $region32
    $region31: #{identity_pallas.1} parent=5 // pred_region
      %s169 = ssub.s32 %s7, 2
      // Predicated region
      $region33: #{identity_pallas.1} parent=31 // pred_check
        %p170 = pneg %p78
      $region34: #{identity_pallas.1} parent=31 // pred_check_branch
        %172 = sbr.rel (%p170) target = $region36
      $region35: #{identity_pallas.1} parent=31 // pred_region
        %s173 = smul.u32 8, %s19
        %p174 = scmp.lt.s32.totalorder %s18, 0
        %s175 = scalar_select %p174, %s18, 0
        %p176 = scmp.lt.s32.totalorder %s173, 15
        %s177 = scalar_select %p176, %s173, 15
        %s178 = smul.addr %s175, 16
        %s179 = sadd.s32 %s177, %s178
        %s180 = scalar_lea.vmem %s1, %s179
      $region36: #{identity_pallas.1} parent=31 // pred_fallthru
        _
    $region32: #{identity_pallas.1} parent=5 // pred_fallthru
      _
  $region6: #{identity_pallas.1} parent=0 // loop_footer
    %s11 = sadd.s32 1, %s7
  $region7: #{identity_pallas.1} parent=0 // loop_footer_branch
    %6 = sbr.rel target = $region3
  $region8: #{identity_pallas.1} parent=0 // loop_exit
    _

</llo_original>
